<compile_context>
chip_gen: v6e
topology: v6e:2x2x1
jax: 0.10.0
libtpu: 0.0.40
codegen_flags: <defaults>
</compile_context>

<pallas_src>
import jax
import jax.numpy as jnp
from jax.experimental import pallas as pl
from jax.experimental.pallas import tpu as pltpu


def _make_kernel(N, block_n, tiles_per_slice, needs_mask):
    def kernel(rep_ref, neg_ref, acc_ref):
        s = pl.program_id(0)   # parallel slice axis
        i = pl.program_id(1)   # N-tile (reduction) axis

        @pl.when(i == 0)
        def _init():
            acc_ref[...] = jnp.zeros_like(acc_ref)

        rep = rep_ref[...]                       # (B, D), input dtype
        neg = neg_ref[...]                       # (B, tn, D), input dtype

        # diff / relu in the input dtype; square + accumulate in f32.
        diff = neg - rep[:, None, :]
        hinge = jnp.maximum(diff, jnp.zeros((), diff.dtype)).astype(jnp.float32)
        sq = hinge * hinge                       # (B, tn, D) f32

        if needs_mask:
            # Mask rows past N (ragged last tile / fully-clamped extra tile).
            tile_idx = s * tiles_per_slice + i
            n_start = tile_idx * block_n
            n_ids = n_start + jax.lax.broadcasted_iota(
                jnp.int32, (1, block_n, 1), 1)
            sq = jnp.where(n_ids < N, sq, jnp.float32(0.0))

        # Reduce only over the N-tile axis; keep (B, D) lane-resident partials.
        acc_ref[...] += jnp.sum(sq, axis=1)

    return kernel


def order_criterion(rep, neg_rep, block_n=None, tile_bytes_target=2 << 20):
    """Pallas implementation of OrderCriterion.forward. Returns an f32 scalar."""
    B, N, D = neg_rep.shape
    assert rep.shape == (B, D), (rep.shape, neg_rep.shape)

    itemsize = jnp.dtype(neg_rep.dtype).itemsize
    row_bytes = B * D * itemsize  # bytes per unit of N in a tile

    if block_n is None:
        if N <= 8:
            block_n = N  # equals full dim -> allowed even if not multiple of 8
        else:
            block_n = max(8, tile_bytes_target // row_bytes)
            block_n = min((int(block_n) // 8) * 8, (N // 8) * 8)
    block_n = int(block_n)

    T = pl.cdiv(N, block_n)       # number of N tiles
    S = 2 if T >= 2 else 1        # parallel slices (megacore on v7x)
    tiles_per_slice = pl.cdiv(T, S)

    needs_mask = (N % block_n != 0) or (S * tiles_per_slice != T)

    if S * tiles_per_slice == T:
        def neg_index_map(s, i):
            return (0, s * tiles_per_slice + i, 0)
    else:
        # Extra (fully masked) tiles are clamped to the last valid block.
        def neg_index_map(s, i):
            return (0, jnp.minimum(s * tiles_per_slice + i, T - 1), 0)

    kernel = _make_kernel(N, block_n, tiles_per_slice, needs_mask)

    # VMEM budget: double-buffered neg tile + rep + accumulators + headroom.
    tile_bytes = B * block_n * D * itemsize
    vmem_need = 2 * tile_bytes + 2 * B * D * itemsize + S * B * D * 4 + (2 << 20)
    vmem_limit = int(min(max(vmem_need, 16 << 20), 48 << 20))

    partial = pl.pallas_call(
        kernel,
        out_shape=jax.ShapeDtypeStruct((S, B, D), jnp.float32),
        grid_spec=pltpu.PrefetchScalarGridSpec(
            num_scalar_prefetch=0,
            grid=(S, tiles_per_slice),
            in_specs=[
                pl.BlockSpec((B, D), lambda s, i: (0, 0)),           # rep (resident)
                pl.BlockSpec((B, block_n, D), neg_index_map),        # neg tile
            ],
            # Per-slice accumulator, resident across the "arbitrary" axis.
            out_specs=pl.BlockSpec((None, B, D), lambda s, i: (s, 0, 0)),
        ),
        compiler_params=pltpu.CompilerParams(
            dimension_semantics=("parallel", "arbitrary"),
            vmem_limit_bytes=vmem_limit,
        ),
    )(rep, neg_rep)

    # Tiny final reduction of the (S, B, D) partial sums.
    return jnp.sum(partial)


def _reference(rep, neg_rep):
    rep_b = jnp.broadcast_to(rep[:, None, :], neg_rep.shape)
    return jnp.sum(jnp.maximum(neg_rep - rep_b, 0.0) ** 2)


if __name__ == "__main__":
    key = jax.random.PRNGKey(0)
    k1, k2, k3, k4 = jax.random.split(key, 4)

    # Primary small test (shapes implied by the module: B=2, N=8, D=32).
    B, N, D = 2, 8, 32
    rep = jax.random.normal(k1, (B, D), dtype=jnp.float32)
    neg_rep = jax.random.normal(k2, (B, N, D), dtype=jnp.float32)
    loss = jax.block_until_ready(order_criterion(rep, neg_rep))
    ref = _reference(rep, neg_rep)
    assert jnp.allclose(loss, ref, rtol=1e-5, atol=1e-5), (loss, ref)

    # Ragged-N test: exercises in-kernel masking, tile-index clamping and the
    # parallel slice axis (grid (2, 2), one partial tile + one fully-masked).
    B2, N2, D2 = 2, 20, 32
    rep2 = jax.random.normal(k3, (B2, D2), dtype=jnp.float32)
    neg2 = jax.random.normal(k4, (B2, N2, D2), dtype=jnp.float32)
    loss2 = jax.block_until_ready(order_criterion(rep2, neg2, block_n=8))
    ref2 = _reference(rep2, neg2)
    assert jnp.allclose(loss2, ref2, rtol=1e-5, atol=1e-5), (loss2, ref2)

    print("KERNEL_OK")
</pallas_src>

<mosaic_0001>
module attributes {stable_mosaic.version = 11 : i64} {
  func.func @kernel(%arg0: i32, %arg1: i32, %arg2: memref<2x32xf32, #tpu.memory_space<vmem>>, %arg3: memref<2x8x32xf32, #tpu.memory_space<vmem>>, %arg4: memref<1x2x32xf32, #tpu.memory_space<vmem>>) attributes {dimension_semantics = [#tpu.dimension_semantics<parallel>, #tpu.dimension_semantics<arbitrary>], iteration_bounds = array<i64: 1, 1>, scalar_prefetch = 0 : i64, scratch_operands = 0 : i64, tpu.core_type = #tpu.core_type<tc>, window_params = [{pipeline_mode = #tpu.pipeline_mode<synchronous>, transform_indices = @transform_0, window_bounds = array<i64: 2, 32>}, {transform_indices = @transform_1, window_bounds = array<i64: 2, 8, 32>}, {transform_indices = @transform_2, window_bounds = array<i64: 1, 2, 32>}]} {
    %c0_i32 = arith.constant 0 : i32
    %0 = arith.cmpi eq, %arg1, %c0_i32 : i32
    %1 = arith.extui %0 : i1 to i32
    %c0_i32_0 = arith.constant 0 : i32
    %2 = arith.cmpi ne, %1, %c0_i32_0 : i32
    scf.if %2 {
      %cst_12 = arith.constant 0.000000e+00 : f32
      %18 = vector.broadcast %cst_12 : f32 to vector<2x32xf32>
      %c0_13 = arith.constant 0 : index
      %c0_14 = arith.constant 0 : index
      %c0_15 = arith.constant 0 : index
      %19 = vector.load %arg4[%c0_13, %c0_14, %c0_15] : memref<1x2x32xf32, #tpu.memory_space<vmem>>, vector<1x2x32xf32>
      %20 = vector.shape_cast %19 : vector<1x2x32xf32> to vector<2x32xf32>
      %21 = vector.shape_cast %18 : vector<2x32xf32> to vector<1x2x32xf32>
      tpu.vector_store %arg4[%c0_13, %c0_14, %c0_15], %21 {strides = array<i32>} : memref<1x2x32xf32, #tpu.memory_space<vmem>>, vector<1x2x32xf32>,
    } else {
    }
    %c0 = arith.constant 0 : index
    %c0_1 = arith.constant 0 : index
    %3 = vector.load %arg2[%c0, %c0_1] : memref<2x32xf32, #tpu.memory_space<vmem>>, vector<2x32xf32>
    %c0_2 = arith.constant 0 : index
    %c0_3 = arith.constant 0 : index
    %c0_4 = arith.constant 0 : index
    %4 = vector.load %arg3[%c0_2, %c0_3, %c0_4] : memref<2x8x32xf32, #tpu.memory_space<vmem>>, vector<2x8x32xf32>
    %5 = vector.shape_cast %3 : vector<2x32xf32> to vector<2x1x32xf32>
    %6 = vector.broadcast %5 : vector<2x1x32xf32> to vector<2x8x32xf32>
    %7 = arith.subf %4, %6 : vector<2x8x32xf32>
    %cst = arith.constant 0.000000e+00 : f32
    %8 = vector.broadcast %cst : f32 to vector<2x8x32xf32>
    %9 = arith.maximumf %7, %8 : vector<2x8x32xf32>
    %10 = arith.mulf %9, %9 : vector<2x8x32xf32>
    %c0_5 = arith.constant 0 : index
    %c0_6 = arith.constant 0 : index
    %c0_7 = arith.constant 0 : index
    %11 = vector.load %arg4[%c0_5, %c0_6, %c0_7] : memref<1x2x32xf32, #tpu.memory_space<vmem>>, vector<1x2x32xf32>
    %12 = vector.shape_cast %11 : vector<1x2x32xf32> to vector<2x32xf32>
    %cst_8 = arith.constant dense<0.000000e+00> : vector<2x32xf32>
    %13 = vector.multi_reduction <add>, %10, %cst_8 [1] : vector<2x8x32xf32> to vector<2x32xf32>
    %14 = arith.addf %12, %13 : vector<2x32xf32>
    %c0_9 = arith.constant 0 : index
    %c0_10 = arith.constant 0 : index
    %c0_11 = arith.constant 0 : index
    %15 = vector.load %arg4[%c0_9, %c0_10, %c0_11] : memref<1x2x32xf32, #tpu.memory_space<vmem>>, vector<1x2x32xf32>
    %16 = vector.shape_cast %15 : vector<1x2x32xf32> to vector<2x32xf32>
    %17 = vector.shape_cast %14 : vector<2x32xf32> to vector<1x2x32xf32>
    tpu.vector_store %arg4[%c0_9, %c0_10, %c0_11], %17 {strides = array<i32>} : memref<1x2x32xf32, #tpu.memory_space<vmem>>, vector<1x2x32xf32>,
    return
  }
  func.func @transform_0(%arg0: i32, %arg1: i32) -> (i32, i32) {
    %c0_i32 = arith.constant 0 : i32
    %c0_i32_0 = arith.constant 0 : i32
    %c0_i32_1 = arith.constant 0 : i32
    return %c0_i32, %c0_i32_0 : i32, i32
  }
  func.func @transform_1(%arg0: i32, %arg1: i32) -> (i32, i32, i32) {
    %c1_i32 = arith.constant 1 : i32
    %0 = arith.muli %arg0, %c1_i32 : i32
    %1 = arith.addi %0, %arg1 : i32
    %c0_i32 = arith.constant 0 : i32
    %c0_i32_0 = arith.constant 0 : i32
    %c0_i32_1 = arith.constant 0 : i32
    return %c0_i32, %1, %c0_i32_0 : i32, i32, i32
  }
  func.func @transform_2(%arg0: i32, %arg1: i32) -> (i32, i32, i32) {
    %c0_i32 = arith.constant 0 : i32
    %c0_i32_0 = arith.constant 0 : i32
    %c0_i32_1 = arith.constant 0 : i32
    return %arg0, %c0_i32, %c0_i32_0 : i32, i32, i32
  }
}

</mosaic_0001>

<llo_original>
// kernel: tpu_custom_call.1
$region0: #{tpu_custom_call.1}
  #allocation0 [shape = 'u32[]', space=smem, size = 0x4, offset = 0x4, fixed_abs, tag = 'smem constant byte address 0x4 - core index']
  #allocation1 [shape = 'u32[144,128]{1,0:T(1,128)}', space=vmem, size = 0x12000, scoped, tag = 'internal scratch']
  %s0 = inlined_call_operand.hbm [shape: f32[2,32], index: 0, kind: input, shape index: {}]
  %s1 = inlined_call_operand.hbm [shape: f32[2,8,32], index: 1, kind: input, shape index: {}]
  %s2 = inlined_call_operand.hbm [shape: f32[1,2,32], index: 2, kind: output, shape index: {}]
  %s3 = sld [smem:[#allocation0]]
  $region30: #{tpu_custom_call.1} parent=0
    _
  %s5 = ssub.s32 1, %s3
  %s6 = scalar_select 0, %s5, %s3
  $region1: #{tpu_custom_call.1} parent=0
    #allocation2 [shape = 'u8[1024]{0}', space=vmem, size = 0x400, scoped, tag = 'input window, operand 0, single buffered']
    #allocation3 [shape = 's32[1]{0}', space=sflag, size = 0x4, scoped, tag = 'scoped memory for tpu_custom_call.1']
    #allocation4 [shape = 's32[1]{0}', space=sflag, size = 0x4, scoped, tag = 'scoped memory for tpu_custom_call.1']
    #allocation5 [shape = 'u8[8192]{0}', space=vmem, size = 0x2000, scoped, tag = 'input window, operand 1, single buffered']
    #allocation6 [shape = 's32[1]{0}', space=sflag, size = 0x4, scoped, tag = 'scoped memory for tpu_custom_call.1']
    #allocation7 [shape = 'u8[1024]{0}', space=vmem, size = 0x400, scoped, tag = 'output window, operand 0, single buffered']
    %7 = vsyncpa [#allocation3], 0
    %8 = vsyncpa [#allocation6], 0
    %9 = vsyncpa [#allocation4], 0
    // Predicated region
    $region2: #{tpu_custom_call.1} parent=1 // pred_check
      _
    $region3: #{tpu_custom_call.1} parent=1 // pred_check_branch
      %11 = sbr.rel (0) target = $region5
    $region4: #{tpu_custom_call.1} parent=1 // pred_region
      %s13 = ssub.s32 32, 32
      %14 = vsyncadd [#allocation3], %s13
      %s16 = sshll.u32 [#allocation2], 4
      %s17 = int_to_ptr.vmem [resolvable:$true] %s16
      %19 = dma.hbm_to_vmem [thread:$0]  %s0, 32, %s17, [#allocation3]
    $region5: #{tpu_custom_call.1} parent=1 // pred_fallthru
      _
    // Predicated region
    $region6: #{tpu_custom_call.1} parent=1 // pred_check
      _
    $region7: #{tpu_custom_call.1} parent=1 // pred_check_branch
      %21 = sbr.rel (0) target = $region9
    $region8: #{tpu_custom_call.1} parent=1 // pred_region
      %s22 = sadd.s32 0, 0
      %s24 = ssub.s32 256, 256
      %25 = vsyncadd [#allocation6], %s24
      %s26 = smul.addr %s22, 128
      %s27 = scalar_lea.hbm %s1, %s26
      %s28 = sshll.u32 [#allocation5], 4
      %s29 = int_to_ptr.vmem [resolvable:$true] %s28
      %34 = dma.hbm_to_vmem [thread:$0]  %s27, 256, %s29, [#allocation6], 128, 128, 8
    $region9: #{tpu_custom_call.1} parent=1 // pred_fallthru
      _
    // Predicated region
    $region10: #{tpu_custom_call.1} parent=1 // pred_check
      _
    $region11: #{tpu_custom_call.1} parent=1 // pred_check_branch
      %36 = sbr.rel (0) target = $region13
    $region12: #{tpu_custom_call.1} parent=1 // pred_region
      %37 = dma.done [#allocation3], 32
    $region13: #{tpu_custom_call.1} parent=1 // pred_fallthru
      _
    // Predicated region
    $region14: #{tpu_custom_call.1} parent=1 // pred_check
      _
    $region15: #{tpu_custom_call.1} parent=1 // pred_check_branch
      %39 = sbr.rel (0) target = $region17
    $region16: #{tpu_custom_call.1} parent=1 // pred_region
      %40 = dma.done [#allocation6], 256
    $region17: #{tpu_custom_call.1} parent=1 // pred_fallthru
      _
    %s41 = sadd.s32 0, 0
    %p42 = scmp.eq.s32.totalorder 0, 0
    // Predicated region
    $region18: #{tpu_custom_call.1} parent=1 // pred_check
      %p43 = pneg %p42
    $region19: #{tpu_custom_call.1} parent=1 // pred_check_branch
      %45 = sbr.rel (%p43) target = $region21
    $region20: #{tpu_custom_call.1} parent=1 // pred_region
      %vm46 = vcmask 254976
      %47 = vst.msk [vmem:[#allocation7] sm:$0x3] %vm46, 0.0
    $region21: #{tpu_custom_call.1} parent=1 // pred_fallthru
      _
    %v48 = vld [vmem:[#allocation2] sm:$0x3]
    %v49 = vld [vmem:[#allocation5] sm:$0xff]
    %v50 = vld [vmem:[#allocation5 + $0x8] sm:$0xff]
    %v53 = vunpack.c.l.s4 1966171168
    %v54 = vunpack.c.0.s8 %v53
    %v55 = vlaneseq
    %v56 = vshrl.u32 %v55, 7
    %v57 = vsub.s32 %v54, %v56
    %v58 = vrot.slane %v48, %v57
    %v59 = vcombine.high %v58, %v58
    %v61 = vunpack.c.l.s4 1966171168
    %v62 = vunpack.c.0.s8 %v61
    %v63 = vlaneseq
    %v64 = vshrl.u32 %v63, 7
    %v65 = vsub.s32 %v62, %v64
    %v66 = vrot.slane %v58, %v65
    %v68 = vunpack.c.l.s4 1966171168
    %v69 = vunpack.c.0.s8 %v68
    %v70 = vlaneseq
    %v71 = vshrl.u32 %v70, 7
    %v72 = vsub.s32 %v69, %v71
    %v73 = vrot.slane %v59, %v72
    %v74 = vlaneseq
    %v75 = vshrl.u32 %v74, 7
    %v76 = vsub.s32 0, %v75
    %v77 = vrot.slane %v66, %v76
    %v78 = vlaneseq
    %v79 = vshrl.u32 %v78, 7
    %v80 = vsub.s32 0, %v79
    %v81 = vrot.slane %v73, %v80
    %v84 = vsub.f32 %v49, %v77
    %v85 = vsub.f32 %v50, %v81
    %v86 = vmax.f32 %v84, 0.0
    %v87 = vmax.f32 %v85, 0.0
    %v88 = vmul.f32 %v86, %v86
    %v89 = vmul.f32 %v87, %v87
    %v90 = vld [vmem:[#allocation7] sm:$0x3]
    %vm91 = vcmask 261120
    %v92 = vsel %vm91, %v88, 0.0
    %v93 = vrot.slane %v92, 4
    %v94 = vadd.f32 %v92, %v93
    %v95 = vrot.slane %v94, 2
    %v96 = vadd.f32 %v94, %v95
    %v97 = vrot.slane %v96, 1
    %v98 = vadd.f32 %v96, %v97
    %v99 = vsel %vm91, %v89, 0.0
    %v100 = vrot.slane %v99, 4
    %v101 = vadd.f32 %v99, %v100
    %v102 = vrot.slane %v101, 2
    %v103 = vadd.f32 %v101, %v102
    %v104 = vrot.slane %v103, 1
    %v105 = vadd.f32 %v103, %v104
    %vm108 = vcmask 1041409
    %v109 = vsel %vm108, %v105, %v98
    %v111 = vadd.f32 %v90, %v109
    %vm112 = vcmask 254976
    %113 = vst.msk [vmem:[#allocation7] sm:$0x3] %vm112, %v111
    // Predicated region
    $region22: #{tpu_custom_call.1} parent=1 // pred_check
      _
    $region23: #{tpu_custom_call.1} parent=1 // pred_check_branch
      %115 = sbr.rel (0) target = $region25
    $region24: #{tpu_custom_call.1} parent=1 // pred_region
      %s117 = ssub.s32 32, 32
      %118 = vsyncadd [#allocation4], %s117
      %s120 = sshll.u32 [#allocation7], 4
      %s121 = int_to_ptr.vmem [resolvable:$true] %s120
      %123 = dma.vmem_to_hbm [thread:$0]  %s121, 32, %s2, [#allocation4]
    $region25: #{tpu_custom_call.1} parent=1 // pred_fallthru
      _
    // Predicated region
    $region26: #{tpu_custom_call.1} parent=1 // pred_check
      _
    $region27: #{tpu_custom_call.1} parent=1 // pred_check_branch
      %125 = sbr.rel (0) target = $region29
    $region28: #{tpu_custom_call.1} parent=1 // pred_region
      %126 = dma.done [#allocation4], 32
    $region29: #{tpu_custom_call.1} parent=1 // pred_fallthru
      _
    %127 = vsyncpa [#allocation3], 1
    %128 = vsyncpa [#allocation6], 1
    %129 = vsyncpa [#allocation4], 1

</llo_original>
